<compile_context>
chip_gen: v5e
topology: v5e:2x2
jax: 0.10.0
libtpu: 0.0.40
codegen_flags: <defaults>
</compile_context>

<pallas_src>
import functools
import math

import jax
import jax.numpy as jnp
from jax import lax
from jax.experimental import pallas as pl
from jax.experimental.pallas import tpu as pltpu

_CHUNK = 512  # lanes processed per inner-loop iteration (multiple of 128)


def _round_up(a, m):
    return pl.cdiv(a, m) * m


def _default_activation_dtype():
    """bf16 activation math where the EUP/VPU are bf16-native (v6e/v7x), else f32."""
    try:
        kind = jax.devices()[0].device_kind.lower()
    except Exception:  # pragma: no cover - be conservative if query fails
        return jnp.float32
    if "v6" in kind or "v7" in kind:
        return jnp.bfloat16
    return jnp.float32


def learned_fn_kernel(x_ref, w1_ref, b1_ref, w2_ref, b2_ref, w3_ref, b3_ref, o_ref,
                      *, act_dtype, chunk):
    # x_ref: (2, Bt)   w*: (out, in)   b*: (out, 1)   o_ref: (1, Bt)
    # Weights are tiny (a few hundred floats); load them once per grid step.
    w1 = w1_ref[...]
    b1 = b1_ref[...]
    w2 = w2_ref[...]
    b2 = b2_ref[...]
    w3 = w3_ref[...]
    b3 = b3_ref[...]

    bt = x_ref.shape[1]
    n_chunks = bt // chunk  # static

    def body(c, carry):
        off = pl.multiple_of(c * chunk, 128)
        x = x_ref[:, pl.ds(off, chunk)]                                   # (2, chunk)

        # 0.5 of tanh(0.5*z) is pre-folded into w1/b1/w2/b2 by the wrapper.
        z1 = jnp.dot(w1, x, preferred_element_type=jnp.float32) + b1      # (20, chunk)
        h1 = jnp.tanh(z1.astype(act_dtype)).astype(jnp.float32)

        z2 = jnp.dot(w2, h1, preferred_element_type=jnp.float32) + b2     # (10, chunk)
        h2 = jnp.tanh(z2.astype(act_dtype)).astype(jnp.float32)

        z3 = jnp.dot(w3, h2, preferred_element_type=jnp.float32) + b3     # (1, chunk)
        o_ref[:, pl.ds(off, chunk)] = z3.astype(o_ref.dtype)
        return carry

    lax.fori_loop(0, n_chunks, body, 0, unroll=False)


def learned_fn(x, params, block_b=32768, activation_dtype=None):
    """Full MLP forward in one pallas_call, tiled over the batch (batch on lanes)."""
    w1, b1, w2, b2, w3, b3 = params
    B = x.shape[0]
    if activation_dtype is None:
        activation_dtype = _default_activation_dtype()

    # Wrapper-side layout + parameter prep (one-time, outside the hot loop):
    #   batch -> lanes, weights -> (out, in), biases -> (out, 1),
    #   fold the 0.5 of tanh(0.5*z) into layers 1 & 2 (layer 3 has no activation).
    xt = x.T.astype(jnp.float32)                 # (2, B)
    w1t, b1t = 0.5 * w1.T, 0.5 * b1.T            # (20, 2), (20, 1)
    w2t, b2t = 0.5 * w2.T, 0.5 * b2.T            # (10, 20), (10, 1)
    w3t, b3t = w3.T, b3.T                        # (1, 10), (1, 1)
    # TODO(synk): optional v5e-only micro-opt: ship x as bf16 to halve input DMA
    # (kernel dots already accumulate in f32); kept f32 here for exactness.

    # Batch tile: multiple of _CHUNK, at most block_b, and capped so the grid has
    # at least 2 steps whenever the batch is big enough (feeds both v7x TCs).
    Bt = min(max(block_b, _CHUNK), _round_up(B, _CHUNK))
    if B > 2 * _CHUNK:
        Bt = min(Bt, _round_up(pl.cdiv(B, 2), _CHUNK))
    Bt = _round_up(max(Bt, _CHUNK), _CHUNK)
    Bp = _round_up(B, Bt)
    if Bp != B:
        xt = jnp.pad(xt, ((0, 0), (0, Bp - B)))  # padded lanes sliced off below

    const = lambda i: (0, 0)  # weights/biases: same (whole-array) block every step
    kernel = functools.partial(learned_fn_kernel,
                               act_dtype=activation_dtype, chunk=_CHUNK)
    out = pl.pallas_call(
        kernel,
        out_shape=jax.ShapeDtypeStruct((1, Bp), jnp.float32),
        grid=(Bp // Bt,),
        in_specs=[
            pl.BlockSpec((2, Bt), lambda i: (0, i)),    # x tile (pipelined)
            pl.BlockSpec((20, 2), const),               # w1 (VMEM resident)
            pl.BlockSpec((20, 1), const),               # b1
            pl.BlockSpec((10, 20), const),              # w2
            pl.BlockSpec((10, 1), const),               # b2
            pl.BlockSpec((1, 10), const),               # w3
            pl.BlockSpec((1, 1), const),                # b3
        ],
        out_specs=pl.BlockSpec((1, Bt), lambda i: (0, i)),
        compiler_params=pltpu.CompilerParams(
            dimension_semantics=("parallel",),          # batch axis across TCs (v7x)
        ),
    )(xt, w1t, b1t, w2t, b2t, w3t, b3t)

    return out[:, :B].T                                 # (B, 1)


def init_params(key):
    """Deterministic init mimicking torch.nn.Linear default (U(-1/sqrt(fan_in), +))."""
    dims = [(2, 20), (20, 10), (10, 1)]
    params = []
    for (fan_in, fan_out) in dims:
        key, kw, kb = jax.random.split(key, 3)
        bound = 1.0 / math.sqrt(fan_in)
        w = jax.random.uniform(kw, (fan_in, fan_out), jnp.float32, -bound, bound)
        b = jax.random.uniform(kb, (1, fan_out), jnp.float32, -bound, bound)
        params += [w, b]
    return tuple(params)


def learned_fn_ref(x, params):
    """Pure-JAX reference using the original Sigmoidal formula from the PyTorch spec."""
    w1, b1, w2, b2, w3, b3 = params

    def sig(v):
        z = jnp.exp(-v)
        return (1.0 - z) / (1.0 + z)

    h = sig(x @ w1 + b1)
    h = sig(h @ w2 + b2)
    return h @ w3 + b3


if __name__ == "__main__":
    key = jax.random.PRNGKey(0)
    key, kx = jax.random.split(key)

    # Batch chosen so padding, a multi-step (pipelined, megacore-shardable) grid and
    # the multi-chunk inner loop are all exercised: B=1500 -> Bt=1024, 2 grid steps.
    B = 1500
    x = jax.random.normal(kx, (B, 2), jnp.float32)
    params = init_params(key)

    ref = learned_fn_ref(x, params)

    # 1) f32 activation math: exact-correctness gate against the reference.
    out_f32 = jax.block_until_ready(learned_fn(x, params, activation_dtype=jnp.float32))
    assert out_f32.shape == (B, 1), out_f32.shape
    assert jnp.allclose(out_f32, ref, atol=1e-5, rtol=1e-5), (out_f32, ref)

    # 2) Device-default activation dtype (bf16 tanh on v6e/v7x, f32 on v5e):
    #    looser tolerance when the EUP runs in bf16.
    out_auto = jax.block_until_ready(learned_fn(x, params))
    assert out_auto.shape == (B, 1), out_auto.shape
    assert jnp.allclose(out_auto, ref, atol=5e-2, rtol=5e-2), (out_auto, ref)

    print("KERNEL_OK")
</pallas_src>

<mosaic_0001>
module attributes {stable_mosaic.version = 11 : i64} {
  func.func @learned_fn_kernel(%arg0: i32, %arg1: memref<2x1024xf32, #tpu.memory_space<vmem>>, %arg2: memref<20x2xf32, #tpu.memory_space<vmem>>, %arg3: memref<20x1xf32, #tpu.memory_space<vmem>>, %arg4: memref<10x20xf32, #tpu.memory_space<vmem>>, %arg5: memref<10x1xf32, #tpu.memory_space<vmem>>, %arg6: memref<1x10xf32, #tpu.memory_space<vmem>>, %arg7: memref<1x1xf32, #tpu.memory_space<vmem>>, %arg8: memref<1x1024xf32, #tpu.memory_space<vmem>>) attributes {dimension_semantics = [#tpu.dimension_semantics<parallel>], iteration_bounds = array<i64: 2>, scalar_prefetch = 0 : i64, scratch_operands = 0 : i64, tpu.core_type = #tpu.core_type<tc>, window_params = [{transform_indices = @transform_0, window_bounds = array<i64: 2, 1024>}, {pipeline_mode = #tpu.pipeline_mode<synchronous>, transform_indices = @transform_1, window_bounds = array<i64: 20, 2>}, {pipeline_mode = #tpu.pipeline_mode<synchronous>, transform_indices = @transform_2, window_bounds = array<i64: 20, 1>}, {pipeline_mode = #tpu.pipeline_mode<synchronous>, transform_indices = @transform_3, window_bounds = array<i64: 10, 20>}, {pipeline_mode = #tpu.pipeline_mode<synchronous>, transform_indices = @transform_4, window_bounds = array<i64: 10, 1>}, {pipeline_mode = #tpu.pipeline_mode<synchronous>, transform_indices = @transform_5, window_bounds = array<i64: 1, 10>}, {pipeline_mode = #tpu.pipeline_mode<synchronous>, transform_indices = @transform_6, window_bounds = array<i64: 1, 1>}, {transform_indices = @transform_7, window_bounds = array<i64: 1, 1024>}]} {
    %c0 = arith.constant 0 : index
    %c0_0 = arith.constant 0 : index
    %0 = vector.load %arg2[%c0, %c0_0] : memref<20x2xf32, #tpu.memory_space<vmem>>, vector<20x2xf32>
    %c0_1 = arith.constant 0 : index
    %c0_2 = arith.constant 0 : index
    %1 = vector.load %arg3[%c0_1, %c0_2] : memref<20x1xf32, #tpu.memory_space<vmem>>, vector<20x1xf32>
    %c0_3 = arith.constant 0 : index
    %c0_4 = arith.constant 0 : index
    %2 = vector.load %arg4[%c0_3, %c0_4] : memref<10x20xf32, #tpu.memory_space<vmem>>, vector<10x20xf32>
    %c0_5 = arith.constant 0 : index
    %c0_6 = arith.constant 0 : index
    %3 = vector.load %arg5[%c0_5, %c0_6] : memref<10x1xf32, #tpu.memory_space<vmem>>, vector<10x1xf32>
    %c0_7 = arith.constant 0 : index
    %c0_8 = arith.constant 0 : index
    %4 = vector.load %arg6[%c0_7, %c0_8] : memref<1x10xf32, #tpu.memory_space<vmem>>, vector<1x10xf32>
    %c0_9 = arith.constant 0 : index
    %c0_10 = arith.constant 0 : index
    %5 = vector.load %arg7[%c0_9, %c0_10] : memref<1x1xf32, #tpu.memory_space<vmem>>, vector<1x1xf32>
    %c0_i32 = arith.constant 0 : i32
    %c2_i32 = arith.constant 2 : i32
    %6 = arith.addi %c0_i32, %c2_i32 : i32
    %c1_i32 = arith.constant 1 : i32
    scf.for %arg9 = %c0_i32 to %6 step %c1_i32  : i32 {
      %c512_i32 = arith.constant 512 : i32
      %7 = arith.muli %arg9, %c512_i32 : i32
      %8 = tpu.assume_multiple %7, 128 : i32
      %c0_12 = arith.constant 0 : index
      %9 = arith.index_cast %8 : i32 to index
      %10 = vector.load %arg1[%c0_12, %9] : memref<2x1024xf32, #tpu.memory_space<vmem>>, vector<2x512xf32>
      %cst = arith.constant dense<0.000000e+00> : vector<20x512xf32>
      %11 = tpu.matmul %0, %10, %cst {dimension_numbers = #tpu.dot_dimension_numbers<[1], [0], [0], [1], [0, 0, 1, 1], [], []>} : vector<20x2xf32>, vector<2x512xf32>, vector<20x512xf32> -> vector<20x512xf32>
      %12 = vector.broadcast %1 : vector<20x1xf32> to vector<20x512xf32>
      %13 = arith.addf %11, %12 : vector<20x512xf32>
      %14 = math.tanh %13 : vector<20x512xf32>
      %cst_13 = arith.constant dense<0.000000e+00> : vector<10x512xf32>
      %15 = tpu.matmul %2, %14, %cst_13 {dimension_numbers = #tpu.dot_dimension_numbers<[1], [0], [0], [1], [0, 0, 1, 1], [], []>} : vector<10x20xf32>, vector<20x512xf32>, vector<10x512xf32> -> vector<10x512xf32>
      %16 = vector.broadcast %3 : vector<10x1xf32> to vector<10x512xf32>
      %17 = arith.addf %15, %16 : vector<10x512xf32>
      %18 = math.tanh %17 : vector<10x512xf32>
      %cst_14 = arith.constant dense<0.000000e+00> : vector<1x512xf32>
      %19 = tpu.matmul %4, %18, %cst_14 {dimension_numbers = #tpu.dot_dimension_numbers<[1], [0], [0], [1], [0, 0, 1, 1], [], []>} : vector<1x10xf32>, vector<10x512xf32>, vector<1x512xf32> -> vector<1x512xf32>
      %20 = vector.broadcast %5 : vector<1x1xf32> to vector<1x512xf32>
      %21 = arith.addf %19, %20 : vector<1x512xf32>
      %c0_15 = arith.constant 0 : index
      %22 = arith.index_cast %8 : i32 to index
      %23 = vector.load %arg8[%c0_15, %22] : memref<1x1024xf32, #tpu.memory_space<vmem>>, vector<1x512xf32>
      tpu.vector_store %arg8[%c0_15, %22], %21 {strides = array<i32>} : memref<1x1024xf32, #tpu.memory_space<vmem>>, vector<1x512xf32>,
    }
    %c2_i32_11 = arith.constant 2 : i32
    return
  }
  func.func @transform_0(%arg0: i32) -> (i32, i32) {
    %c0_i32 = arith.constant 0 : i32
    %c0_i32_0 = arith.constant 0 : i32
    return %c0_i32, %arg0 : i32, i32
  }
  func.func @transform_1(%arg0: i32) -> (i32, i32) {
    %c0_i32 = arith.constant 0 : i32
    %c0_i32_0 = arith.constant 0 : i32
    %c0_i32_1 = arith.constant 0 : i32
    return %c0_i32, %c0_i32_0 : i32, i32
  }
  func.func @transform_2(%arg0: i32) -> (i32, i32) {
    %c0_i32 = arith.constant 0 : i32
    %c0_i32_0 = arith.constant 0 : i32
    %c0_i32_1 = arith.constant 0 : i32
    return %c0_i32, %c0_i32_0 : i32, i32
  }
  func.func @transform_3(%arg0: i32) -> (i32, i32) {
    %c0_i32 = arith.constant 0 : i32
    %c0_i32_0 = arith.constant 0 : i32
    %c0_i32_1 = arith.constant 0 : i32
    return %c0_i32, %c0_i32_0 : i32, i32
  }
  func.func @transform_4(%arg0: i32) -> (i32, i32) {
    %c0_i32 = arith.constant 0 : i32
    %c0_i32_0 = arith.constant 0 : i32
    %c0_i32_1 = arith.constant 0 : i32
    return %c0_i32, %c0_i32_0 : i32, i32
  }
  func.func @transform_5(%arg0: i32) -> (i32, i32) {
    %c0_i32 = arith.constant 0 : i32
    %c0_i32_0 = arith.constant 0 : i32
    %c0_i32_1 = arith.constant 0 : i32
    return %c0_i32, %c0_i32_0 : i32, i32
  }
  func.func @transform_6(%arg0: i32) -> (i32, i32) {
    %c0_i32 = arith.constant 0 : i32
    %c0_i32_0 = arith.constant 0 : i32
    %c0_i32_1 = arith.constant 0 : i32
    return %c0_i32, %c0_i32_0 : i32, i32
  }
  func.func @transform_7(%arg0: i32) -> (i32, i32) {
    %c0_i32 = arith.constant 0 : i32
    %c0_i32_0 = arith.constant 0 : i32
    return %c0_i32, %arg0 : i32, i32
  }
}

</mosaic_0001>

<llo_original>
// kernel: tpu_custom_call.1
$region0: #{tpu_custom_call.1}
  #allocation0 [shape = 'u32[]', space=smem, size = 0x4, offset = 0x4, fixed_abs, tag = 'smem constant byte address 0x4 - core index']
  #allocation1 [shape = 'u32[72,128]{1,0:T(1,128)}', space=vmem, size = 0x9000, scoped, tag = 'internal scratch']
  #allocation2 [shape = 'f32[1,1]{1,0:T(1,128)S(1)}', space=vmem, size = 0x200, scoped, tag = 'scoped memory for tpu_custom_call.1']
  %s0 = inlined_call_operand.vmem [shape: f32[2,2048], index: 0, kind: input, shape index: {}]
  %s1 = inlined_call_operand.vmem [shape: f32[20,2], index: 1, kind: input, shape index: {}]
  %s2 = inlined_call_operand.vmem [shape: f32[20,1], index: 2, kind: input, shape index: {}]
  %s3 = inlined_call_operand.vmem [shape: f32[10,20], index: 3, kind: input, shape index: {}]
  %s4 = inlined_call_operand.vmem [shape: f32[10,1], index: 4, kind: input, shape index: {}]
  %s5 = inlined_call_operand.vmem [shape: f32[1,10], index: 5, kind: input, shape index: {}]
  %s6 = inlined_call_operand.<no memory space> [shape: f32[1,1], index: 6, kind: input, shape index: {}]
  %s7 = inlined_call_operand.hbm [shape: f32[1,2048], index: 7, kind: output, shape index: {}]
  %s8 = sld [smem:[#allocation0]]
  $region68: #{tpu_custom_call.1} parent=0
    _
  %s10 = ssub.s32 1, %s8
  %s11 = scalar_select 0, %s10, %s8
  %v12 = vstv %s6
  %13 = vst [vmem:[#allocation2] sm:$0x1] %v12
  $region1: #{tpu_custom_call.1} parent=0
    #allocation3 [shape = 'u8[8192]{0}', space=vmem, size = 0x2000, scoped, tag = 'output window, operand 0']
    #allocation4 [shape = 's32[2]{0}', space=sflag, size = 0x8, scoped, tag = 'scoped memory for tpu_custom_call.1']
    %14 = vsyncpa [#allocation4], 0
    %s15 = scalar_lea.sflag [#allocation4], 1
    %16 = vsyncpa %s15, 0
    loop: start=0, step=1, limit=4
    $region2: #{tpu_custom_call.1} parent=1 // loop_pre_header
      _
    $region3: #{tpu_custom_call.1} parent=1 // loop_header
      %s18 = sphi 0, %s22
      %p19 = scmp.ge.s32.totalorder %s18, 4
      %s28 = sphi 0, %s30
      %s31 = sphi 0, %s28
      %s32 = sphi 0, %s31
      %s48 = sphi 0, %s32
      %s52 = sphi 0, %s52
      %s54 = sphi 0, %s52
      %s55 = sphi 0, %s54
      %s69 = sphi 0, %s55
      %s73 = sphi 0, %s73
      %s75 = sphi 0, %s73
      %s76 = sphi 0, %s75
      %s90 = sphi 0, %s76
      %s94 = sphi 0, %s94
      %s96 = sphi 0, %s94
      %s97 = sphi 0, %s96
      %s111 = sphi 0, %s97
      %s115 = sphi 0, %s115
      %s117 = sphi 0, %s115
      %s118 = sphi 0, %s117
      %s132 = sphi 0, %s118
      %s136 = sphi 0, %s136
      %s138 = sphi 0, %s136
      %s139 = sphi 0, %s138
      %s153 = sphi 0, %s139
      %s157 = sphi 0, %s157
      %s159 = sphi 0, %s157
      %s160 = sphi 0, %s159
      %s174 = sphi 0, %s160
      %s180 = sphi 0, %s182
      %s183 = sphi 0, %s180
      %s184 = sphi 0, %s183
      %s200 = sphi 0, %s184
    $region4: #{tpu_custom_call.1} parent=1 // loop_header_branch
      %21 = sbr.rel (%p19) target = $region8
    $region5: #{tpu_custom_call.1} parent=1 // loop_body
      %s23 = ssub.s32 %s18, 1
      %s24 = ssub.s32 %s18, 2
      %s25 = sadd.s32 %s18, 1
      %s26 = ssub.s32 %s18, %s25
      %p27 = scmp.eq.s32.totalorder %s26, 0
      %s29 = sadd.s32 %s28, 1
      %s30 = scalar_select %p27, %s28, %s29
      %p33 = pneg %p27
      %p34 = scmp.eq.s32.totalorder %s18, 1
      %p35 = por %p33, %p34
      %p36 = scmp.ne.s32.totalorder %s28, %s31
      %p37 = scmp.eq.s32.totalorder %s18, 0
      %p38 = por %p36, %p37
      %p39 = scmp.ne.s32.totalorder %s28, %s31
      %p40 = scmp.eq.s32.totalorder %s23, 1
      %p41 = por %p39, %p40
      %p42 = scmp.ne.s32.totalorder %s31, %s32
      %p43 = scmp.eq.s32.totalorder %s23, 0
      %p44 = por %p42, %p43
      %p45 = scmp.ne.s32.totalorder %s31, %s32
      %p46 = scmp.eq.s32.totalorder %s24, 1
      %p47 = por %p45, %p46
      %p49 = scmp.ne.s32.totalorder %s32, %s48
      %p50 = scmp.eq.s32.totalorder %s24, 0
      %p51 = por %p49, %p50
      %s53 = sadd.s32 %s52, 1
      %p56 = scmp.eq.s32.totalorder %s18, 1
      %p57 = scmp.ne.s32.totalorder %s52, %s54
      %p58 = scmp.eq.s32.totalorder %s18, 0
      %p59 = por %p57, %p58
      %p60 = scmp.ne.s32.totalorder %s52, %s54
      %p61 = scmp.eq.s32.totalorder %s23, 1
      %p62 = por %p60, %p61
      %p63 = scmp.ne.s32.totalorder %s54, %s55
      %p64 = scmp.eq.s32.totalorder %s23, 0
      %p65 = por %p63, %p64
      %p66 = scmp.ne.s32.totalorder %s54, %s55
      %p67 = scmp.eq.s32.totalorder %s24, 1
      %p68 = por %p66, %p67
      %p70 = scmp.ne.s32.totalorder %s55, %s69
      %p71 = scmp.eq.s32.totalorder %s24, 0
      %p72 = por %p70, %p71
      %s74 = sadd.s32 %s73, 1
      %p77 = scmp.eq.s32.totalorder %s18, 1
      %p78 = scmp.ne.s32.totalorder %s73, %s75
      %p79 = scmp.eq.s32.totalorder %s18, 0
      %p80 = por %p78, %p79
      %p81 = scmp.ne.s32.totalorder %s73, %s75
      %p82 = scmp.eq.s32.totalorder %s23, 1
      %p83 = por %p81, %p82
      %p84 = scmp.ne.s32.totalorder %s75, %s76
      %p85 = scmp.eq.s32.totalorder %s23, 0
      %p86 = por %p84, %p85
      %p87 = scmp.ne.s32.totalorder %s75, %s76
      %p88 = scmp.eq.s32.totalorder %s24, 1
      %p89 = por %p87, %p88
      %p91 = scmp.ne.s32.totalorder %s76, %s90
      %p92 = scmp.eq.s32.totalorder %s24, 0
      %p93 = por %p91, %p92
      %s95 = sadd.s32 %s94, 1
      %p98 = scmp.eq.s32.totalorder %s18, 1
      %p99 = scmp.ne.s32.totalorder %s94, %s96
      %p100 = scmp.eq.s32.totalorder %s18, 0
      %p101 = por %p99, %p100
      %p102 = scmp.ne.s32.totalorder %s94, %s96
      %p103 = scmp.eq.s32.totalorder %s23, 1
      %p104 = por %p102, %p103
      %p105 = scmp.ne.s32.totalorder %s96, %s97
      %p106 = scmp.eq.s32.totalorder %s23, 0
      %p107 = por %p105, %p106
      %p108 = scmp.ne.s32.totalorder %s96, %s97
      %p109 = scmp.eq.s32.totalorder %s24, 1
      %p110 = por %p108, %p109
      %p112 = scmp.ne.s32.totalorder %s97, %s111
      %p113 = scmp.eq.s32.totalorder %s24, 0
      %p114 = por %p112, %p113
      %s116 = sadd.s32 %s115, 1
      %p119 = scmp.eq.s32.totalorder %s18, 1
      %p120 = scmp.ne.s32.totalorder %s115, %s117
      %p121 = scmp.eq.s32.totalorder %s18, 0
      %p122 = por %p120, %p121
      %p123 = scmp.ne.s32.totalorder %s115, %s117
      %p124 = scmp.eq.s32.totalorder %s23, 1
      %p125 = por %p123, %p124
      %p126 = scmp.ne.s32.totalorder %s117, %s118
      %p127 = scmp.eq.s32.totalorder %s23, 0
      %p128 = por %p126, %p127
      %p129 = scmp.ne.s32.totalorder %s117, %s118
      %p130 = scmp.eq.s32.totalorder %s24, 1
      %p131 = por %p129, %p130
      %p133 = scmp.ne.s32.totalorder %s118, %s132
      %p134 = scmp.eq.s32.totalorder %s24, 0
      %p135 = por %p133, %p134
      %s137 = sadd.s32 %s136, 1
      %p140 = scmp.eq.s32.totalorder %s18, 1
      %p141 = scmp.ne.s32.totalorder %s136, %s138
      %p142 = scmp.eq.s32.totalorder %s18, 0
      %p143 = por %p141, %p142
      %p144 = scmp.ne.s32.totalorder %s136, %s138
      %p145 = scmp.eq.s32.totalorder %s23, 1
      %p146 = por %p144, %p145
      %p147 = scmp.ne.s32.totalorder %s138, %s139
      %p148 = scmp.eq.s32.totalorder %s23, 0
      %p149 = por %p147, %p148
      %p150 = scmp.ne.s32.totalorder %s138, %s139
      %p151 = scmp.eq.s32.totalorder %s24, 1
      %p152 = por %p150, %p151
      %p154 = scmp.ne.s32.totalorder %s139, %s153
      %p155 = scmp.eq.s32.totalorder %s24, 0
      %p156 = por %p154, %p155
      %s158 = sadd.s32 %s157, 1
      %p161 = scmp.eq.s32.totalorder %s18, 1
      %p162 = scmp.ne.s32.totalorder %s157, %s159
      %p163 = scmp.eq.s32.totalorder %s18, 0
      %p164 = por %p162, %p163
      %p165 = scmp.ne.s32.totalorder %s157, %s159
      %p166 = scmp.eq.s32.totalorder %s23, 1
      %p167 = por %p165, %p166
      %p168 = scmp.ne.s32.totalorder %s159, %s160
      %p169 = scmp.eq.s32.totalorder %s23, 0
      %p170 = por %p168, %p169
      %p171 = scmp.ne.s32.totalorder %s159, %s160
      %p172 = scmp.eq.s32.totalorder %s24, 1
      %p173 = por %p171, %p172
      %p175 = scmp.ne.s32.totalorder %s160, %s174
      %p176 = scmp.eq.s32.totalorder %s24, 0
      %p177 = por %p175, %p176
      %s178 = ssub.s32 %s18, %s25
      %p179 = scmp.eq.s32.totalorder %s178, 0
      %s181 = sadd.s32 %s180, 1
      %s182 = scalar_select %p179, %s180, %s181
      %p185 = pneg %p179
      %p186 = scmp.eq.s32.totalorder %s18, 1
      %p187 = por %p185, %p186
      %p188 = scmp.ne.s32.totalorder %s180, %s183
      %p189 = scmp.eq.s32.totalorder %s18, 0
      %p190 = por %p188, %p189
      %p191 = scmp.ne.s32.totalorder %s180, %s183
      %p192 = scmp.eq.s32.totalorder %s23, 1
      %p193 = por %p191, %p192
      %p194 = scmp.ne.s32.totalorder %s183, %s184
      %p195 = scmp.eq.s32.totalorder %s23, 0
      %p196 = por %p194, %p195
      %p197 = scmp.ne.s32.totalorder %s183, %s184
      %p198 = scmp.eq.s32.totalorder %s24, 1
      %p199 = por %p197, %p198
      %p201 = scmp.ne.s32.totalorder %s184, %s200
      %p202 = scmp.eq.s32.totalorder %s24, 0
      %p203 = por %p201, %p202
      %p204 = scmp.le.s32.totalorder 1, %s18
      %p205 = scmp.lt.s32.totalorder %s18, 3
      %p206 = pnand %p204, %p205
      %p207 = pneg %p206
      // Predicated region
      $region9: #{tpu_custom_call.1} parent=5 // pred_check
        _
      $region10: #{tpu_custom_call.1} parent=5 // pred_check_branch
        %209 = sbr.rel (%p206) target = $region12
      $region11: #{tpu_custom_call.1} parent=5 // pred_region
        %s210 = ssub.s32 %s18, 1
        // Predicated region
        $region13: #{tpu_custom_call.1} parent=11 // pred_check
          %p211 = pneg %p65
        $region14: #{tpu_custom_call.1} parent=11 // pred_check_branch
          %213 = sbr.rel (%p211) target = $region16
        $region15: #{tpu_custom_call.1} parent=11 // pred_region
          _
        $region16: #{tpu_custom_call.1} parent=11 // pred_fallthru
          _
        // Predicated region
        $region17: #{tpu_custom_call.1} parent=11 // pred_check
          %p214 = pneg %p86
        $region18: #{tpu_custom_call.1} parent=11 // pred_check_branch
          %216 = sbr.rel (%p214) target = $region20
        $region19: #{tpu_custom_call.1} parent=11 // pred_region
          _
        $region20: #{tpu_custom_call.1} parent=11 // pred_fallthru
          _
        // Predicated region
        $region21: #{tpu_custom_call.1} parent=11 // pred_check
          %p217 = pneg %p107
        $region22: #{tpu_custom_call.1} parent=11 // pred_check_branch
          %219 = sbr.rel (%p217) target = $region24
        $region23: #{tpu_custom_call.1} parent=11 // pred_region
          _
        $region24: #{tpu_custom_call.1} parent=11 // pred_fallthru
          _
        // Predicated region
        $region25: #{tpu_custom_call.1} parent=11 // pred_check
          %p220 = pneg %p128
        $region26: #{tpu_custom_call.1} parent=11 // pred_check_branch
          %222 = sbr.rel (%p220) target = $region28
        $region27: #{tpu_custom_call.1} parent=11 // pred_region
          _
        $region28: #{tpu_custom_call.1} parent=11 // pred_fallthru
          _
        // Predicated region
        $region29: #{tpu_custom_call.1} parent=11 // pred_check
          %p223 = pneg %p149
        $region30: #{tpu_custom_call.1} parent=11 // pred_check_branch
          %225 = sbr.rel (%p223) target = $region32
        $region31: #{tpu_custom_call.1} parent=11 // pred_region
          _
        $region32: #{tpu_custom_call.1} parent=11 // pred_fallthru
          _
        // Predicated region
        $region33: #{tpu_custom_call.1} parent=11 // pred_check
          %p226 = pneg %p170
        $region34: #{tpu_custom_call.1} parent=11 // pred_check_branch
          %228 = sbr.rel (%p226) target = $region36
        $region35: #{tpu_custom_call.1} parent=11 // pred_region
          _
        $region36: #{tpu_custom_call.1} parent=11 // pred_fallthru
          _
      $region12: #{tpu_custom_call.1} parent=5 // pred_fallthru
        _
      %p229 = scmp.lt.s32.totalorder %s18, 2
      // Predicated region
      $region37: #{tpu_custom_call.1} parent=5 // pred_check
        %p230 = pneg %p229
      $region38: #{tpu_custom_call.1} parent=5 // pred_check_branch
        %232 = sbr.rel (%p230) target = $region40
      $region39: #{tpu_custom_call.1} parent=5 // pred_region
        // Predicated region
        $region41: #{tpu_custom_call.1} parent=39 // pred_check
          %p233 = pneg %p38
        $region42: #{tpu_custom_call.1} parent=39 // pred_check_branch
          %235 = sbr.rel (%p233) target = $region44
        $region43: #{tpu_custom_call.1} parent=39 // pred_region
          %s236 = smul.u32 8, %s18
          %p237 = scmp.lt.s32.totalorder %s236, 15
          %s238 = scalar_select %p237, %s236, 15
          %s239 = smul.addr %s238, 2
          %s240 = scalar_lea.vmem %s0, %s239
          %s241 = smul.u32 8, %s18
        $region44: #{tpu_custom_call.1} parent=39 // pred_fallthru
          _
      $region40: #{tpu_custom_call.1} parent=5 // pred_fallthru
        _
      %p242 = scmp.le.s32.totalorder 1, %s18
      %p243 = scmp.lt.s32.totalorder %s18, 3
      %p244 = pnand %p242, %p243
      %p245 = pneg %p244
      // Predicated region
      $region45: #{tpu_custom_call.1} parent=5 // pred_check
        _
      $region46: #{tpu_custom_call.1} parent=5 // pred_check_branch
        %247 = sbr.rel (%p244) target = $region48
      $region47: #{tpu_custom_call.1} parent=5 // pred_region
        %s248 = ssub.s32 %s18, 1
        %s249 = smul.u32 8, %s23
        %p250 = scmp.lt.s32.totalorder %s249, 15
        %s251 = scalar_select %p250, %s249, 15
        %s252 = smul.addr %s251, 2
        %s253 = scalar_lea.vmem %s0, %s252
        %p254 = pneg %p44
        %p255 = pneg %p41
        %p256 = pneg %p65
        %p257 = pneg %p62
        %p258 = pneg %p86
        %p259 = pneg %p83
        %p260 = pneg %p107
        %p261 = pneg %p104
        %p262 = pneg %p128
        %p263 = pneg %p125
        %p264 = pneg %p149
        %p265 = pneg %p146
        %p266 = pneg %p170
        %p267 = pneg %p167
        %p268 = pneg %p196
        %p269 = pneg %p193
        %s270 = sand.u32 %s183, 1
        %s271 = scalar_lea.sflag [#allocation4], %s270
        %s272 = sand.u32 %s183, 1
        %s273 = smul.addr %s272, 8
        %s274 = scalar_lea.vmem [#allocation3], %s273
        %s275 = smul.u32 8, %s23
        %p276 = scmp.lt.s32.totalorder %s275, 15
        %s277 = scalar_select %p276, %s275, 15
        %s278 = smul.addr %s277, 2
        %s279 = scalar_lea.vmem %s0, %s278
        %s280 = smul.u32 8, %s23
        %s281 = smul.u32 8, %s23
        %v282 = vld [vmem:[%s1] sm:$0xff]
        %v283 = vld [vmem:[%s1 + $0x8] sm:$0xff]
        %v284 = vld [vmem:[%s1 + $0x10] sm:$0xf]
        %v285 = vld [vmem:[%s2] sm:$0xff]
        %v286 = vld [vmem:[%s2 + $0x8] sm:$0xff]
        %v287 = vld [vmem:[%s2 + $0x10] sm:$0xf]
        %v288 = vld [vmem:[%s3] sm:$0xff]
        %v289 = vld [vmem:[%s3 + $0x8] sm:$0x3]
        %v290 = vld [vmem:[%s4] sm:$0xff]
        %v291 = vld [vmem:[%s4 + $0x8] sm:$0x3]
        %v292 = vld [vmem:[%s5] sm:$0x1]
        %v293 = vld [vmem:[#allocation2] sm:$0x1]
        loop: start=0, step=1, limit=2
        $region49: #{tpu_custom_call.1} parent=47 // loop_pre_header
          _
        $region50: #{tpu_custom_call.1} parent=47 // loop_header
          %s295 = sphi 0, %s299
          %p296 = scmp.ge.s32.totalorder %s295, 2
        $region51: #{tpu_custom_call.1} parent=47 // loop_header_branch
          %298 = sbr.rel (%p296) target = $region55
        $region52: #{tpu_custom_call.1} parent=47 // loop_body
          %s300 = smul.u32 %s295, 512
          %s301 = sshra.s32 %s300, 7
          %s302 = sand.u32 %s300, 127
          %s303 = smul.addr %s301, 2
          %s304 = scalar_lea.vmem %s279, %s303
          %v305 = vld [vmem:[%s304] sm:$0xff]
          %307 = vset.pattern.permute.xlu0 0
          %308 = vperm.xlu0 %307, %v285
          %v309 = vpop.permute.xlu0 %308
          %312 = vset.pattern.permute.xlu0 0
          %313 = vperm.xlu0 %312, %v286
          %v314 = vpop.permute.xlu0 %313
          %317 = vset.pattern.permute.xlu0 0
          %318 = vperm.xlu0 %317, %v287
          %v319 = vpop.permute.xlu0 %318
          %322 = vst [vmem:[#allocation1] ss:$4 sm:$0xff] %v305
          %v323 = vld.sshfl [vmem:[#allocation1] sm:$0xff pattern:$0x73625140]
          %v324 = vld.sshfl [vmem:[#allocation1 + $0x8] sm:$0xff pattern:$0x73625140]
          %v325 = vld.sshfl [vmem:[#allocation1 + $0x10] sm:$0xff pattern:$0x73625140]
          %v326 = vld.sshfl [vmem:[#allocation1 + $0x18] sm:$0xff pattern:$0x73625140]
          %vm327 = vcmask 15360
          %v329 = vsel %vm327, %v282, 0
          %v332 = vsel %vm327, %v283, 0
          %v335 = vsel %vm327, %v284, 0
          %vm337 = vcmask 1041408
          %v338 = vsel %vm337, %v323, 0
          %v340 = vsel %vm337, %v324, 0
          %v342 = vsel %vm337, %v325, 0
          %v344 = vsel %vm337, %v326, 0
          %346 = vmatpush.msra.mxu0 0.0
          %347 = vmatpush.msra.mxu0 0.0
          %348 = vmatpush.msra.mxu0 0.0
          %349 = vmatpush.msra.mxu0 0.0
          %350 = vmatpush.msra.mxu0 0.0
          %351 = vmatpush.msra.mxu0 0.0
          %352 = vmatpush.msra.mxu0 0.0
          %353 = vmatpush.msra.mxu0 0.0
          %354 = vmatpush.msra.mxu0 0.0
          %355 = vmatpush.msra.mxu0 0.0
          %356 = vmatpush.msra.mxu0 0.0
          %357 = vmatpush.msra.mxu0 0.0
          %358 = vmatpush.msra.mxu0 0.0
          %359 = vmatpush.msra.mxu0 0.0
          %360 = vmatpush.msra.mxu0 0.0
          %361 = vmatpush.msra.mxu0 %v338
          %362 = vmatmul.f32.gmra.mxu0 %v329
          %v363 = vpop.f32.mrf.mxu0
          %v364 = vadd.f32 %v309, %v363
          %365 = vmatmul.f32.gmra.mxu0 %v332
          %v366 = vpop.f32.mrf.mxu0
          %v367 = vadd.f32 %v314, %v366
          %368 = vmatmul.f32.gmra.mxu0 %v335
          %v369 = vpop.f32.mrf.mxu0
          %v370 = vadd.f32 %v319, %v369
          %371 = vdwg.mxu0
          %372 = vmatpush.msra.mxu0 0.0
          %373 = vmatpush.msra.mxu0 0.0
          %374 = vmatpush.msra.mxu0 0.0
          %375 = vmatpush.msra.mxu0 0.0
          %376 = vmatpush.msra.mxu0 0.0
          %377 = vmatpush.msra.mxu0 0.0
          %378 = vmatpush.msra.mxu0 0.0
          %379 = vmatpush.msra.mxu0 0.0
          %380 = vmatpush.msra.mxu0 0.0
          %381 = vmatpush.msra.mxu0 0.0
          %382 = vmatpush.msra.mxu0 0.0
          %383 = vmatpush.msra.mxu0 0.0
          %384 = vmatpush.msra.mxu0 0.0
          %385 = vmatpush.msra.mxu0 0.0
          %386 = vmatpush.msra.mxu0 0.0
          %387 = vmatpush.msra.mxu0 %v340
          %388 = vmatmul.f32.gmra.mxu0 %v329
          %v389 = vpop.f32.mrf.mxu0
          %v390 = vadd.f32 %v309, %v389
          %391 = vmatmul.f32.gmra.mxu0 %v332
          %v392 = vpop.f32.mrf.mxu0
          %v393 = vadd.f32 %v314, %v392
          %394 = vmatmul.f32.gmra.mxu0 %v335
          %v395 = vpop.f32.mrf.mxu0
          %v396 = vadd.f32 %v319, %v395
          %397 = vdwg.mxu0
          %398 = vmatpush.msra.mxu0 0.0
          %399 = vmatpush.msra.mxu0 0.0
          %400 = vmatpush.msra.mxu0 0.0
          %401 = vmatpush.msra.mxu0 0.0
          %402 = vmatpush.msra.mxu0 0.0
          %403 = vmatpush.msra.mxu0 0.0
          %404 = vmatpush.msra.mxu0 0.0
          %405 = vmatpush.msra.mxu0 0.0
          %406 = vmatpush.msra.mxu0 0.0
          %407 = vmatpush.msra.mxu0 0.0
          %408 = vmatpush.msra.mxu0 0.0
          %409 = vmatpush.msra.mxu0 0.0
          %410 = vmatpush.msra.mxu0 0.0
          %411 = vmatpush.msra.mxu0 0.0
          %412 = vmatpush.msra.mxu0 0.0
          %413 = vmatpush.msra.mxu0 %v342
          %414 = vmatmul.f32.gmra.mxu0 %v329
          %v415 = vpop.f32.mrf.mxu0
          %v416 = vadd.f32 %v309, %v415
          %417 = vmatmul.f32.gmra.mxu0 %v332
          %v418 = vpop.f32.mrf.mxu0
          %v419 = vadd.f32 %v314, %v418
          %420 = vmatmul.f32.gmra.mxu0 %v335
          %v421 = vpop.f32.mrf.mxu0
          %v422 = vadd.f32 %v319, %v421
          %423 = vdwg.mxu0
          %424 = vmatpush.msra.mxu0 0.0
          %425 = vmatpush.msra.mxu0 0.0
          %426 = vmatpush.msra.mxu0 0.0
          %427 = vmatpush.msra.mxu0 0.0
          %428 = vmatpush.msra.mxu0 0.0
          %429 = vmatpush.msra.mxu0 0.0
          %430 = vmatpush.msra.mxu0 0.0
          %431 = vmatpush.msra.mxu0 0.0
          %432 = vmatpush.msra.mxu0 0.0
          %433 = vmatpush.msra.mxu0 0.0
          %434 = vmatpush.msra.mxu0 0.0
          %435 = vmatpush.msra.mxu0 0.0
          %436 = vmatpush.msra.mxu0 0.0
          %437 = vmatpush.msra.mxu0 0.0
          %438 = vmatpush.msra.mxu0 0.0
          %439 = vmatpush.msra.mxu0 %v344
          %440 = vmatmul.f32.gmra.mxu0 %v329
          %v441 = vpop.f32.mrf.mxu0
          %v442 = vadd.f32 %v309, %v441
          %443 = vmatmul.f32.gmra.mxu0 %v332
          %v444 = vpop.f32.mrf.mxu0
          %v445 = vadd.f32 %v314, %v444
          %446 = vmatmul.f32.gmra.mxu0 %v335
          %v447 = vpop.f32.mrf.mxu0
          %v448 = vadd.f32 %v319, %v447
          %449 = vdwg.mxu0
          %v450 = vtanh.pop %v364
          %v451 = vtanh.pop %v390
          %v452 = vtanh.pop %v416
          %v453 = vtanh.pop %v442
          %v454 = vtanh.pop %v367
          %v455 = vtanh.pop %v393
          %v456 = vtanh.pop %v419
          %v457 = vtanh.pop %v445
          %v458 = vtanh.pop %v370
          %v459 = vtanh.pop %v396
          %v460 = vtanh.pop %v422
          %v461 = vtanh.pop %v448
          %463 = vset.pattern.permute.xlu0 0
          %464 = vperm.xlu0 %463, %v290
          %v465 = vpop.permute.xlu0 %464
          %468 = vset.pattern.permute.xlu0 0
          %469 = vperm.xlu0 %468, %v291
          %v470 = vpop.permute.xlu0 %469
          %vm472 = vcmask 162816
          %v474 = vsel %vm472, %v288, 0
          %v477 = vsel %vm472, %v289, 0
          %vm479 = vcmask 1043456
          %v481 = vsel %vm479, %v458, 0
          %v484 = vsel %vm479, %v459, 0
          %v487 = vsel %vm479, %v460, 0
          %v490 = vsel %vm479, %v461, 0
          %492 = vmatpush.msra.mxu0 0.0
          %493 = vmatpush.msra.mxu0 0.0
          %494 = vmatpush.msra.mxu0 0.0
          %495 = vmatpush.msra.mxu0 0.0
          %496 = vmatpush.msra.mxu0 0.0
          %497 = vmatpush.msra.mxu0 0.0
          %498 = vmatpush.msra.mxu0 0.0
          %499 = vmatpush.msra.mxu0 0.0
          %500 = vmatpush.msra.mxu0 0.0
          %501 = vmatpush.msra.mxu0 0.0
          %502 = vmatpush.msra.mxu0 0.0
          %503 = vmatpush.msra.mxu0 0.0
          %504 = vmatpush.msra.mxu0 0.0
          %505 = vmatpush.msra.mxu0 %v481
          %506 = vmatpush.msra.mxu0 %v454
          %507 = vmatpush.msra.mxu0 %v450
          %508 = vmatmul.f32.gmra.mxu0 %v474
          %v509 = vpop.f32.mrf.mxu0
          %v510 = vadd.f32 %v465, %v509
          %511 = vmatmul.f32.gmra.mxu0 %v477
          %v512 = vpop.f32.mrf.mxu0
          %v513 = vadd.f32 %v470, %v512
          %514 = vdwg.mxu0
          %515 = vmatpush.msra.mxu0 0.0
          %516 = vmatpush.msra.mxu0 0.0
          %517 = vmatpush.msra.mxu0 0.0
          %518 = vmatpush.msra.mxu0 0.0
          %519 = vmatpush.msra.mxu0 0.0
          %520 = vmatpush.msra.mxu0 0.0
          %521 = vmatpush.msra.mxu0 0.0
          %522 = vmatpush.msra.mxu0 0.0
          %523 = vmatpush.msra.mxu0 0.0
          %524 = vmatpush.msra.mxu0 0.0
          %525 = vmatpush.msra.mxu0 0.0
          %526 = vmatpush.msra.mxu0 0.0
          %527 = vmatpush.msra.mxu0 0.0
          %528 = vmatpush.msra.mxu0 %v484
          %529 = vmatpush.msra.mxu0 %v455
          %530 = vmatpush.msra.mxu0 %v451
          %531 = vmatmul.f32.gmra.mxu0 %v474
          %v532 = vpop.f32.mrf.mxu0
          %v533 = vadd.f32 %v465, %v532
          %534 = vmatmul.f32.gmra.mxu0 %v477
          %v535 = vpop.f32.mrf.mxu0
          %v536 = vadd.f32 %v470, %v535
          %537 = vdwg.mxu0
          %538 = vmatpush.msra.mxu0 0.0
          %539 = vmatpush.msra.mxu0 0.0
          %540 = vmatpush.msra.mxu0 0.0
          %541 = vmatpush.msra.mxu0 0.0
          %542 = vmatpush.msra.mxu0 0.0
          %543 = vmatpush.msra.mxu0 0.0
          %544 = vmatpush.msra.mxu0 0.0
          %545 = vmatpush.msra.mxu0 0.0
          %546 = vmatpush.msra.mxu0 0.0
          %547 = vmatpush.msra.mxu0 0.0
          %548 = vmatpush.msra.mxu0 0.0
          %549 = vmatpush.msra.mxu0 0.0
          %550 = vmatpush.msra.mxu0 0.0
          %551 = vmatpush.msra.mxu0 %v487
          %552 = vmatpush.msra.mxu0 %v456
          %553 = vmatpush.msra.mxu0 %v452
          %554 = vmatmul.f32.gmra.mxu0 %v474
          %v555 = vpop.f32.mrf.mxu0
          %v556 = vadd.f32 %v465, %v555
          %557 = vmatmul.f32.gmra.mxu0 %v477
          %v558 = vpop.f32.mrf.mxu0
          %v559 = vadd.f32 %v470, %v558
          %560 = vdwg.mxu0
          %561 = vmatpush.msra.mxu0 0.0
          %562 = vmatpush.msra.mxu0 0.0
          %563 = vmatpush.msra.mxu0 0.0
          %564 = vmatpush.msra.mxu0 0.0
          %565 = vmatpush.msra.mxu0 0.0
          %566 = vmatpush.msra.mxu0 0.0
          %567 = vmatpush.msra.mxu0 0.0
          %568 = vmatpush.msra.mxu0 0.0
          %569 = vmatpush.msra.mxu0 0.0
          %570 = vmatpush.msra.mxu0 0.0
          %571 = vmatpush.msra.mxu0 0.0
          %572 = vmatpush.msra.mxu0 0.0
          %573 = vmatpush.msra.mxu0 0.0
          %574 = vmatpush.msra.mxu0 %v490
          %575 = vmatpush.msra.mxu0 %v457
          %576 = vmatpush.msra.mxu0 %v453
          %577 = vmatmul.f32.gmra.mxu0 %v474
          %v578 = vpop.f32.mrf.mxu0
          %v579 = vadd.f32 %v465, %v578
          %580 = vmatmul.f32.gmra.mxu0 %v477
          %v581 = vpop.f32.mrf.mxu0
          %v582 = vadd.f32 %v470, %v581
          %583 = vdwg.mxu0
          %v584 = vtanh.pop %v510
          %v585 = vtanh.pop %v533
          %v586 = vtanh.pop %v556
          %v587 = vtanh.pop %v579
          %v588 = vtanh.pop %v513
          %v589 = vtanh.pop %v536
          %v590 = vtanh.pop %v559
          %v591 = vtanh.pop %v582
          %593 = vset.pattern.permute.xlu0 0
          %594 = vperm.xlu0 %593, %v293
          %v595 = vpop.permute.xlu0 %594
          %v597 = vperm.slane %v595, 0
          %vm598 = vcmask 80896
          %v600 = vsel %vm598, %v292, 0
          %v603 = vsel %vm337, %v588, 0
          %v606 = vsel %vm337, %v589, 0
          %v609 = vsel %vm337, %v590, 0
          %v612 = vsel %vm337, %v591, 0
          %614 = vmatpush.msra.mxu0 0.0
          %615 = vmatpush.msra.mxu0 0.0
          %616 = vmatpush.msra.mxu0 0.0
          %617 = vmatpush.msra.mxu0 0.0
          %618 = vmatpush.msra.mxu0 0.0
          %619 = vmatpush.msra.mxu0 0.0
          %620 = vmatpush.msra.mxu0 0.0
          %621 = vmatpush.msra.mxu0 0.0
          %622 = vmatpush.msra.mxu0 0.0
          %623 = vmatpush.msra.mxu0 0.0
          %624 = vmatpush.msra.mxu0 0.0
          %625 = vmatpush.msra.mxu0 0.0
          %626 = vmatpush.msra.mxu0 0.0
          %627 = vmatpush.msra.mxu0 0.0
          %628 = vmatpush.msra.mxu0 %v603
          %629 = vmatpush.msra.mxu0 %v584
          %630 = vmatmul.f32.gmra.mxu0 %v600
          %v631 = vpop.f32.mrf.mxu0
          %v632 = vadd.f32 %v597, %v631
          %633 = vdwg.mxu0
          %634 = vmatpush.msra.mxu0 0.0
          %635 = vmatpush.msra.mxu0 0.0
          %636 = vmatpush.msra.mxu0 0.0
          %637 = vmatpush.msra.mxu0 0.0
          %638 = vmatpush.msra.mxu0 0.0
          %639 = vmatpush.msra.mxu0 0.0
          %640 = vmatpush.msra.mxu0 0.0
          %641 = vmatpush.msra.mxu0 0.0
          %642 = vmatpush.msra.mxu0 0.0
          %643 = vmatpush.msra.mxu0 0.0
          %644 = vmatpush.msra.mxu0 0.0
          %645 = vmatpush.msra.mxu0 0.0
          %646 = vmatpush.msra.mxu0 0.0
          %647 = vmatpush.msra.mxu0 0.0
          %648 = vmatpush.msra.mxu0 %v606
          %649 = vmatpush.msra.mxu0 %v585
          %650 = vmatmul.f32.gmra.mxu0 %v600
          %v651 = vpop.f32.mrf.mxu0
          %v652 = vadd.f32 %v597, %v651
          %653 = vdwg.mxu0
          %654 = vmatpush.msra.mxu0 0.0
          %655 = vmatpush.msra.mxu0 0.0
          %656 = vmatpush.msra.mxu0 0.0
          %657 = vmatpush.msra.mxu0 0.0
          %658 = vmatpush.msra.mxu0 0.0
          %659 = vmatpush.msra.mxu0 0.0
          %660 = vmatpush.msra.mxu0 0.0
          %661 = vmatpush.msra.mxu0 0.0
          %662 = vmatpush.msra.mxu0 0.0
          %663 = vmatpush.msra.mxu0 0.0
          %664 = vmatpush.msra.mxu0 0.0
          %665 = vmatpush.msra.mxu0 0.0
          %666 = vmatpush.msra.mxu0 0.0
          %667 = vmatpush.msra.mxu0 0.0
          %668 = vmatpush.msra.mxu0 %v609
          %669 = vmatpush.msra.mxu0 %v586
          %670 = vmatmul.f32.gmra.mxu0 %v600
          %v671 = vpop.f32.mrf.mxu0
          %v672 = vadd.f32 %v597, %v671
          %673 = vdwg.mxu0
          %674 = vmatpush.msra.mxu0 0.0
          %675 = vmatpush.msra.mxu0 0.0
          %676 = vmatpush.msra.mxu0 0.0
          %677 = vmatpush.msra.mxu0 0.0
          %678 = vmatpush.msra.mxu0 0.0
          %679 = vmatpush.msra.mxu0 0.0
          %680 = vmatpush.msra.mxu0 0.0
          %681 = vmatpush.msra.mxu0 0.0
          %682 = vmatpush.msra.mxu0 0.0
          %683 = vmatpush.msra.mxu0 0.0
          %684 = vmatpush.msra.mxu0 0.0
          %685 = vmatpush.msra.mxu0 0.0
          %686 = vmatpush.msra.mxu0 0.0
          %687 = vmatpush.msra.mxu0 0.0
          %688 = vmatpush.msra.mxu0 %v612
          %689 = vmatpush.msra.mxu0 %v587
          %690 = vmatmul.f32.gmra.mxu0 %v600
          %v691 = vpop.f32.mrf.mxu0
          %v692 = vadd.f32 %v597, %v691
          %693 = vdwg.mxu0
          %v698 = vrot.slane %v652, 7
          %v699 = vrot.slane %v672, 6
          %v700 = vrot.slane %v692, 5
          %vm701 = vcmask 1040384
          %v702 = vsel %vm701, %v632, %v698
          %vm703 = vcmask 1042434
          %v704 = vsel %vm703, %v699, %v700
          %v705 = vsel %vm337, %v702, %v704
          %s707 = scalar_lea.vmem %s274, %s301 [#allocation3]
          %v708 = vlaneseq
          %vm709 = vcmp.ge.s32.totalorder %v708, 0
          %vm710 = vcmp.lt.s32.totalorder %v708, 512
          %vm711 = vmand %vm709, %vm710
          %712 = vst.msk [vmem:[%s707] sm:$0xf] %vm711, %v705
        $region53: #{tpu_custom_call.1} parent=47 // loop_footer
          %s299 = sadd.s32 1, %s295
        $region54: #{tpu_custom_call.1} parent=47 // loop_footer_branch
          %294 = sbr.rel target = $region50
        $region55: #{tpu_custom_call.1} parent=47 // loop_exit
          _
        %s713 = sand.u32 %s183, 1
        %s714 = scalar_lea.sflag [#allocation4], %s713
        %s715 = sand.u32 %s183, 1
        %s716 = smul.addr %s715, 8
        %s717 = scalar_lea.vmem [#allocation3], %s716
        // Predicated region
        $region56: #{tpu_custom_call.1} parent=47 // pred_check
          %p718 = pneg %p193
        $region57: #{tpu_custom_call.1} parent=47 // pred_check_branch
          %720 = sbr.rel (%p718) target = $region59
        $region58: #{tpu_custom_call.1} parent=47 // pred_region
          %s721 = smul.u32 8, %s23
          %723 = vsyncadd %s714, 0
          %s724 = scalar_lea.hbm %s7, %s721
          %s726 = sshll.u32 %s717, 4
          %s727 = int_to_ptr.vmem [resolvable:$true] %s726
          %s728 = sshll.u32 %s724, 4
          %s729 = int_to_ptr.hbm [resolvable:$true] %s728
          %731 = dma.vmem_to_hbm [thread:$0]  %s727, 128, %s729, %s714
        $region59: #{tpu_custom_call.1} parent=47 // pred_fallthru
          _
      $region48: #{tpu_custom_call.1} parent=5 // pred_fallthru
        _
      %p732 = scmp.le.s32.totalorder 2, %s18
      // Predicated region
      $region60: #{tpu_custom_call.1} parent=5 // pred_check
        %p733 = pneg %p732
      $region61: #{tpu_custom_call.1} parent=5 // pred_check_branch
        %735 = sbr.rel (%p733) target = $region63
      $region62: #{tpu_custom_call.1} parent=5 // pred_region
        %s736 = ssub.s32 %s18, 2
        // Predicated region
        $region64: #{tpu_custom_call.1} parent=62 // pred_check
          %p737 = pneg %p199
        $region65: #{tpu_custom_call.1} parent=62 // pred_check_branch
          %739 = sbr.rel (%p737) target = $region67
        $region66: #{tpu_custom_call.1} parent=62 // pred_region
          %s740 = sand.u32 %s184, 1
          %s741 = scalar_lea.sflag [#allocation4], %s740
          %s742 = sand.u32 %s184, 1
          %s743 = smul.addr %s742, 8
          %s744 = scalar_lea.vmem [#allocation3], %s743
          %746 = dma.done %s741, 128
        $region67: #{tpu_custom_call.1} parent=62 // pred_fallthru
          _
      $region63: #{tpu_custom_call.1} parent=5 // pred_fallthru
        _
    $region6: #{tpu_custom_call.1} parent=1 // loop_footer
      %s22 = sadd.s32 1, %s18
    $region7: #{tpu_custom_call.1} parent=1 // loop_footer_branch
      %17 = sbr.rel target = $region3
    $region8: #{tpu_custom_call.1} parent=1 // loop_exit
      _
    %747 = vsyncpa [#allocation4], 1
    %s748 = scalar_lea.sflag [#allocation4], 1
    %749 = vsyncpa %s748, 1

</llo_original>
